<compile_context>
chip_gen: v7x
topology: tpu7x:2x2x1
jax: 0.10.0
libtpu: 0.0.40
codegen_flags: <defaults>
</compile_context>

<pallas_src>
import functools
import math

import jax
import jax.numpy as jnp
from jax.experimental import pallas as pl
from jax.experimental.pallas import tpu as pltpu


def _round_up(v, m):
    return ((v + m - 1) // m) * m


# ---------------------------------------------------------------------------
# Kernel
# ---------------------------------------------------------------------------
def _patch_merging_kernel(x_ref, w_ref, g_ref, b_ref, o_ref, *, eps, pack):
    # x_ref: (tr, 2, W2, 2C)  -- dim 1 = h-parity inside the 2x2 patch
    # w_ref: (2, 2C, 2C)      -- [ [W0;W2], [W1;W3] ] row blocks of the reduction
    # g_ref, b_ref: (1, 2C)   -- LayerNorm affine params
    # o_ref: (tr*W2//pack, pack*2C)
    tr, _, w2, c2 = x_ref.shape
    rows = tr * w2

    # Parity gathers.  For W2 % 8 == 0 the reshape is a pure leading-dim fold
    # (no sublane relayout); for other W2 it is still correct, just a copy.
    x_even = x_ref[:, 0, :, :].reshape(rows, c2)   # [x0 | x2]
    x_odd = x_ref[:, 1, :, :].reshape(rows, c2)    # [x1 | x3]

    # Linear reduction (no bias): two accumulated MXU matmuls, f32 accumulation,
    # operands kept in their native dtype.
    y = jnp.dot(x_even, w_ref[0], preferred_element_type=jnp.float32)
    y = y + jnp.dot(x_odd, w_ref[1], preferred_element_type=jnp.float32)

    # One-pass LayerNorm over the channel axis (f32): sum and sum-of-squares in
    # a single read of y, no 'centered' temporary before the reductions.
    inv_c = jnp.float32(1.0 / c2)
    s1 = jnp.sum(y, axis=-1, keepdims=True)
    s2 = jnp.sum(y * y, axis=-1, keepdims=True)
    mean = s1 * inv_c
    var = jnp.maximum(s2 * inv_c - mean * mean, 0.0)
    rstd = jax.lax.rsqrt(var + eps)
    gam = g_ref[...].astype(jnp.float32)
    bet = b_ref[...].astype(jnp.float32)
    out = (y - mean) * rstd * gam + bet
    out = out.astype(o_ref.dtype)

    if pack > 1:
        # Lane-dense store: pack `pack` consecutive tokens per row so the block
        # is a multiple of 128 lanes wide (full vst + dense output DMA).
        out = out.reshape(rows // pack, pack * c2)
    o_ref[...] = out


# ---------------------------------------------------------------------------
# Host-side helpers
# ---------------------------------------------------------------------------
def _vmem_limit_bytes():
    """Generation-aware VMEM limit: ~half of physical VMEM, capped at 48 MiB.

    128-MiB parts (v5e/v6e) -> 48 MiB; 64-MiB parts (v7x per-core) -> 32 MiB.
    """
    cap = 64 * 1024 * 1024  # conservative fallback
    try:
        cap = int(pltpu.get_tpu_info().vmem_capacity_bytes)
    except Exception:
        pass
    return min(cap // 2, 48 * 1024 * 1024)


@functools.lru_cache(maxsize=None)
def _lane_pack_supported(pack, c2, dtype_name):
    """Compile-only probe: can Mosaic lower the (rows, c2) -> (rows//pack,
    pack*c2) lane-packing reshape used for lane-dense stores?  If not, the
    caller silently falls back to the (correct, proven) unpacked store path."""
    dtype = jnp.dtype(dtype_name)
    rows = 64 * pack

    def probe(x_ref, o_ref):
        o_ref[...] = x_ref[...].reshape(rows // pack, pack * c2)

    try:
        fn = pl.pallas_call(
            probe,
            out_shape=jax.ShapeDtypeStruct((rows // pack, pack * c2), dtype))
        jax.jit(fn).lower(jax.ShapeDtypeStruct((rows, c2), dtype)).compile()
        return True
    except Exception:
        return False


def _choose_row_tile(R, W2, C2, pack, in_item, out_item, w_item, *, budget,
                     target_out_rows=1024, min_out_rows=512, target_steps=8):
    """Tile over the R = B*H/2 axis.

    Aims for ~`target_steps` grid steps (so both v7x TensorCores pipeline) as
    long as each output block keeps >= `min_out_rows` merged tokens, keeps the
    output-block row count a multiple of 8*pack, and sizes against the padded
    VMEM footprint including all materialized temporaries.
    """
    g = (8 * pack) // math.gcd(W2, 8 * pack)   # tr granularity
    if g >= R:
        return R

    c2_l = _round_up(C2, 128)        # lane-padded channel width in VMEM
    w2_s = _round_up(W2, 8)          # sublane-padded W2 inside the 4-D input block
    out_cols_l = _round_up(pack * C2, 128)

    def est(tr):
        rows = tr * W2
        in_blk = tr * 2 * w2_s * c2_l * in_item            # input block (padded layout)
        out_blk = (rows // pack) * out_cols_l * out_item   # output block
        gathers = 2 * rows * c2_l * in_item                # x_even / x_odd copies
        y_f32 = rows * c2_l * 4                            # matmul result
        nrm_f32 = rows * c2_l * 4                          # normalized result pre-cast
        packed = out_blk if pack > 1 else 0                # lane-packed copy
        weights = 2 * _round_up(C2, 8) * c2_l * w_item
        return 2 * in_blk + 2 * out_blk + gathers + y_f32 + nrm_f32 + packed + 2 * weights

    tr = -(-R // target_steps)                       # ~target_steps grid steps
    tr = max(tr, -(-min_out_rows // W2))             # ...but blocks >= ~512 tokens
    tr = min(tr, max(1, target_out_rows // W2))      # ...and <= ~target_out_rows
    tr = min(tr, R)
    if tr < R:
        tr = min(R, max(g, _round_up(tr, g)))
    while tr > g and est(tr) > budget:               # shrink to fit corrected VMEM use
        tr = max(g, ((tr // 2) // g) * g)
    return tr


# ---------------------------------------------------------------------------
# Public wrapper
# ---------------------------------------------------------------------------
def patch_merging(x, H, W, w_reduction, ln_gamma, ln_beta, *,
                  eps=1e-5, target_out_rows=1024):
    """x: (B, H*W, C) -> ((B, (H//2)*(W//2), 2C), H//2, W//2).

    w_reduction must be (4*dim, 2*dim) so that y = x_cat @ w_reduction, i.e.
    the *transpose* of PyTorch nn.Linear's (out_features, in_features) weight.
    """
    B, L, C = x.shape
    assert L == H * W, "input feature has wrong size"
    assert H % 2 == 0 and W % 2 == 0, f"x size ({H}*{W}) are not even."
    H2, W2 = H // 2, W // 2
    C2 = 2 * C
    R = B * H2                       # row-tile axis: pairs of input image rows
    M = R * W2                       # number of merged tokens

    assert w_reduction.shape == (4 * C, C2), (
        "w_reduction must be (4*dim, 2*dim); pass the transpose of the PyTorch "
        "nn.Linear weight (stored as (2*dim, 4*dim)).")

    # Zero-copy view: (B, H*W, C) -> (B*H/2, 2, W/2, 2C)
    # xr[r, p, w2, :] == concat(x[b, 2*h2+p, 2*w2], x[b, 2*h2+p, 2*w2+1])
    xr = x.reshape(R, 2, W2, C2)

    # Re-pack reduction weight rows to match the fused gather order:
    #   even-h row carries [x0 | x2] -> rows [0:C] and [2C:3C]
    #   odd-h  row carries [x1 | x3] -> rows [C:2C] and [3C:4C]
    wq = jnp.stack(
        [jnp.concatenate([w_reduction[0 * C:1 * C], w_reduction[2 * C:3 * C]], axis=0),
         jnp.concatenate([w_reduction[1 * C:2 * C], w_reduction[3 * C:4 * C]], axis=0)],
        axis=0)                                                   # (2, 2C, 2C)
    gamma2d = ln_gamma.reshape(1, C2)
    beta2d = ln_beta.reshape(1, C2)

    # Lane-dense output packing for narrow channel counts (2C < 128).
    pack = 1
    if C2 < 128 and 128 % C2 == 0:
        cand = 128 // C2
        if W2 % cand == 0 and _lane_pack_supported(cand, C2, jnp.dtype(x.dtype).name):
            pack = cand

    vmem_limit = _vmem_limit_bytes()
    tr = _choose_row_tile(
        R, W2, C2, pack,
        x.dtype.itemsize, x.dtype.itemsize, wq.dtype.itemsize,
        budget=(vmem_limit * 3) // 4, target_out_rows=target_out_rows)
    grid = (pl.cdiv(R, tr),)
    out_rows_blk = (tr * W2) // pack
    out_cols = pack * C2

    kernel = functools.partial(_patch_merging_kernel, eps=eps, pack=pack)
    out = pl.pallas_call(
        kernel,
        out_shape=jax.ShapeDtypeStruct((M // pack, out_cols), x.dtype),
        grid_spec=pltpu.PrefetchScalarGridSpec(
            num_scalar_prefetch=0,
            grid=grid,
            in_specs=[
                pl.BlockSpec((tr, 2, W2, C2), lambda i: (i, 0, 0, 0)),
                pl.BlockSpec((2, C2, C2), lambda i: (0, 0, 0)),   # resident weight
                pl.BlockSpec((1, C2), lambda i: (0, 0)),          # resident gamma
                pl.BlockSpec((1, C2), lambda i: (0, 0)),          # resident beta
            ],
            out_specs=pl.BlockSpec((out_rows_blk, out_cols), lambda i: (i, 0)),
        ),
        compiler_params=pltpu.CompilerParams(
            dimension_semantics=("parallel",),
            vmem_limit_bytes=vmem_limit,
        ),
    )(xr, wq, gamma2d, beta2d)

    return out.reshape(B, H2 * W2, C2), H2, W2


# ---------------------------------------------------------------------------
# Pure-JAX reference (matches the PyTorch module forward)
# ---------------------------------------------------------------------------
def _reference(x, H, W, w_reduction, ln_gamma, ln_beta, eps=1e-5):
    B, L, C = x.shape
    xv = x.reshape(B, H, W, C)
    x0 = xv[:, 0::2, 0::2, :]
    x1 = xv[:, 1::2, 0::2, :]
    x2 = xv[:, 0::2, 1::2, :]
    x3 = xv[:, 1::2, 1::2, :]
    xm = jnp.concatenate([x0, x1, x2, x3], axis=-1).reshape(B, -1, 4 * C)
    y = jnp.einsum("blk,kc->blc", xm, w_reduction)
    mean = jnp.mean(y, axis=-1, keepdims=True)
    var = jnp.mean((y - mean) ** 2, axis=-1, keepdims=True)
    yn = (y - mean) / jnp.sqrt(var + eps)
    return yn * ln_gamma + ln_beta


if __name__ == "__main__":
    # Module config: dim (=C) = 32; input tokens B=2, H=W=16 -> x: (2, 256, 32)
    B, H, W, dim = 2, 16, 16, 32
    key = jax.random.PRNGKey(0)
    kx, kw = jax.random.split(key)

    x = jax.random.normal(kx, (B, H * W, dim), dtype=jnp.float32)

    # nn.Linear(4*dim, 2*dim, bias=False), passed as (in=4*dim, out=2*dim) so y = x @ W.
    w_reduction = (jax.random.normal(kw, (4 * dim, 2 * dim), dtype=jnp.float32)
                   * (1.0 / jnp.sqrt(4.0 * dim)))
    # nn.LayerNorm(2*dim) defaults: weight=1, bias=0, eps=1e-5.
    ln_gamma = jnp.ones((2 * dim,), dtype=jnp.float32)
    ln_beta = jnp.zeros((2 * dim,), dtype=jnp.float32)

    out, Hn, Wn = patch_merging(x, H, W, w_reduction, ln_gamma, ln_beta)
    out = jax.block_until_ready(out)

    assert out.shape == (B, (H // 2) * (W // 2), 2 * dim)
    assert (Hn, Wn) == (H // 2, W // 2)

    ref = _reference(x, H, W, w_reduction, ln_gamma, ln_beta)
    assert jnp.allclose(out, ref, atol=1e-4, rtol=1e-4), "mismatch vs reference"

    print("KERNEL_OK")
</pallas_src>

<mosaic_0001>
module attributes {stable_mosaic.version = 11 : i64} {
  func.func @_patch_merging_kernel(%arg0: i32, %arg1: memref<16x2x8x64xf32, #tpu.memory_space<vmem>>, %arg2: memref<2x64x64xf32, #tpu.memory_space<vmem>>, %arg3: memref<1x64xf32, #tpu.memory_space<vmem>>, %arg4: memref<1x64xf32, #tpu.memory_space<vmem>>, %arg5: memref<128x64xf32, #tpu.memory_space<vmem>>) attributes {dimension_semantics = [#tpu.dimension_semantics<parallel>], iteration_bounds = array<i64: 1>, scalar_prefetch = 0 : i64, scratch_operands = 0 : i64, tpu.core_type = #tpu.core_type<tc>, window_params = [{transform_indices = @transform_0, window_bounds = array<i64: 16, 2, 8, 64>}, {pipeline_mode = #tpu.pipeline_mode<synchronous>, transform_indices = @transform_1, window_bounds = array<i64: 2, 64, 64>}, {pipeline_mode = #tpu.pipeline_mode<synchronous>, transform_indices = @transform_2, window_bounds = array<i64: 1, 64>}, {pipeline_mode = #tpu.pipeline_mode<synchronous>, transform_indices = @transform_3, window_bounds = array<i64: 1, 64>}, {transform_indices = @transform_4, window_bounds = array<i64: 128, 64>}]} {
    %c0 = arith.constant 0 : index
    %c0_0 = arith.constant 0 : index
    %c0_1 = arith.constant 0 : index
    %c0_2 = arith.constant 0 : index
    %0 = vector.load %arg1[%c0, %c0_0, %c0_1, %c0_2] : memref<16x2x8x64xf32, #tpu.memory_space<vmem>>, vector<16x1x8x64xf32>
    %1 = vector.shape_cast %0 : vector<16x1x8x64xf32> to vector<16x8x64xf32>
    %2 = vector.shape_cast %1 : vector<16x8x64xf32> to vector<128x64xf32>
    %c0_3 = arith.constant 0 : index
    %c1 = arith.constant 1 : index
    %c0_4 = arith.constant 0 : index
    %c0_5 = arith.constant 0 : index
    %3 = vector.load %arg1[%c0_3, %c1, %c0_4, %c0_5] : memref<16x2x8x64xf32, #tpu.memory_space<vmem>>, vector<16x1x8x64xf32>
    %4 = vector.shape_cast %3 : vector<16x1x8x64xf32> to vector<16x8x64xf32>
    %5 = vector.shape_cast %4 : vector<16x8x64xf32> to vector<128x64xf32>
    %c0_6 = arith.constant 0 : index
    %c0_7 = arith.constant 0 : index
    %c0_8 = arith.constant 0 : index
    %6 = vector.load %arg2[%c0_6, %c0_7, %c0_8] : memref<2x64x64xf32, #tpu.memory_space<vmem>>, vector<1x64x64xf32>
    %7 = vector.shape_cast %6 : vector<1x64x64xf32> to vector<64x64xf32>
    %cst = arith.constant dense<0.000000e+00> : vector<128x64xf32>
    %8 = tpu.matmul %2, %7, %cst {dimension_numbers = #tpu.dot_dimension_numbers<[1], [0], [0], [1], [0, 0, 1, 1], [], []>} : vector<128x64xf32>, vector<64x64xf32>, vector<128x64xf32> -> vector<128x64xf32>
    %c1_9 = arith.constant 1 : index
    %c0_10 = arith.constant 0 : index
    %c0_11 = arith.constant 0 : index
    %9 = vector.load %arg2[%c1_9, %c0_10, %c0_11] : memref<2x64x64xf32, #tpu.memory_space<vmem>>, vector<1x64x64xf32>
    %10 = vector.shape_cast %9 : vector<1x64x64xf32> to vector<64x64xf32>
    %cst_12 = arith.constant dense<0.000000e+00> : vector<128x64xf32>
    %11 = tpu.matmul %5, %10, %cst_12 {dimension_numbers = #tpu.dot_dimension_numbers<[1], [0], [0], [1], [0, 0, 1, 1], [], []>} : vector<128x64xf32>, vector<64x64xf32>, vector<128x64xf32> -> vector<128x64xf32>
    %12 = arith.addf %8, %11 : vector<128x64xf32>
    %cst_13 = arith.constant dense<0.000000e+00> : vector<128xf32>
    %13 = vector.multi_reduction <add>, %12, %cst_13 [1] : vector<128x64xf32> to vector<128xf32>
    %14 = vector.shape_cast %13 : vector<128xf32> to vector<128x1xf32>
    %15 = arith.mulf %12, %12 : vector<128x64xf32>
    %cst_14 = arith.constant dense<0.000000e+00> : vector<128xf32>
    %16 = vector.multi_reduction <add>, %15, %cst_14 [1] : vector<128x64xf32> to vector<128xf32>
    %17 = vector.shape_cast %16 : vector<128xf32> to vector<128x1xf32>
    %cst_15 = arith.constant 1.562500e-02 : f32
    %18 = vector.broadcast %cst_15 : f32 to vector<128x1xf32>
    %19 = arith.mulf %14, %18 : vector<128x1xf32>
    %cst_16 = arith.constant 1.562500e-02 : f32
    %20 = vector.broadcast %cst_16 : f32 to vector<128x1xf32>
    %21 = arith.mulf %17, %20 : vector<128x1xf32>
    %22 = arith.mulf %19, %19 : vector<128x1xf32>
    %23 = arith.subf %21, %22 : vector<128x1xf32>
    %cst_17 = arith.constant 0.000000e+00 : f32
    %24 = vector.broadcast %cst_17 : f32 to vector<128x1xf32>
    %25 = arith.maximumf %23, %24 : vector<128x1xf32>
    %cst_18 = arith.constant 9.99999974E-6 : f32
    %26 = vector.broadcast %cst_18 : f32 to vector<128x1xf32>
    %27 = arith.addf %25, %26 : vector<128x1xf32>
    %28 = math.rsqrt %27 : vector<128x1xf32>
    %c0_19 = arith.constant 0 : index
    %c0_20 = arith.constant 0 : index
    %29 = vector.load %arg3[%c0_19, %c0_20] : memref<1x64xf32, #tpu.memory_space<vmem>>, vector<1x64xf32>
    %c0_21 = arith.constant 0 : index
    %c0_22 = arith.constant 0 : index
    %30 = vector.load %arg4[%c0_21, %c0_22] : memref<1x64xf32, #tpu.memory_space<vmem>>, vector<1x64xf32>
    %31 = vector.broadcast %19 : vector<128x1xf32> to vector<128x64xf32>
    %32 = arith.subf %12, %31 : vector<128x64xf32>
    %33 = vector.broadcast %28 : vector<128x1xf32> to vector<128x64xf32>
    %34 = arith.mulf %32, %33 : vector<128x64xf32>
    %35 = vector.broadcast %29 : vector<1x64xf32> to vector<128x64xf32>
    %36 = arith.mulf %34, %35 : vector<128x64xf32>
    %37 = vector.broadcast %30 : vector<1x64xf32> to vector<128x64xf32>
    %38 = arith.addf %36, %37 : vector<128x64xf32>
    %c0_23 = arith.constant 0 : index
    %c0_24 = arith.constant 0 : index
    %39 = vector.load %arg5[%c0_23, %c0_24] : memref<128x64xf32, #tpu.memory_space<vmem>>, vector<128x64xf32>
    tpu.vector_store %arg5[%c0_23, %c0_24], %38 {strides = array<i32>} : memref<128x64xf32, #tpu.memory_space<vmem>>, vector<128x64xf32>,
    return
  }
  func.func @transform_0(%arg0: i32) -> (i32, i32, i32, i32) {
    %c0_i32 = arith.constant 0 : i32
    %c0_i32_0 = arith.constant 0 : i32
    %c0_i32_1 = arith.constant 0 : i32
    %c0_i32_2 = arith.constant 0 : i32
    return %arg0, %c0_i32, %c0_i32_0, %c0_i32_1 : i32, i32, i32, i32
  }
  func.func @transform_1(%arg0: i32) -> (i32, i32, i32) {
    %c0_i32 = arith.constant 0 : i32
    %c0_i32_0 = arith.constant 0 : i32
    %c0_i32_1 = arith.constant 0 : i32
    %c0_i32_2 = arith.constant 0 : i32
    return %c0_i32, %c0_i32_0, %c0_i32_1 : i32, i32, i32
  }
  func.func @transform_2(%arg0: i32) -> (i32, i32) {
    %c0_i32 = arith.constant 0 : i32
    %c0_i32_0 = arith.constant 0 : i32
    %c0_i32_1 = arith.constant 0 : i32
    return %c0_i32, %c0_i32_0 : i32, i32
  }
  func.func @transform_3(%arg0: i32) -> (i32, i32) {
    %c0_i32 = arith.constant 0 : i32
    %c0_i32_0 = arith.constant 0 : i32
    %c0_i32_1 = arith.constant 0 : i32
    return %c0_i32, %c0_i32_0 : i32, i32
  }
  func.func @transform_4(%arg0: i32) -> (i32, i32) {
    %c0_i32 = arith.constant 0 : i32
    %c0_i32_0 = arith.constant 0 : i32
    return %arg0, %c0_i32 : i32, i32
  }
}

</mosaic_0001>

<llo_original>
// kernel: tpu_custom_call.1
$region0: #{tpu_custom_call.1}
  #allocation0 [shape = 'u32[]', space=smem, size = 0x4, offset = 0x4, fixed_abs, tag = 'smem constant byte address 0x4 - core index']
  #allocation1 [shape = 'u32[144,128]{1,0:T(1,128)}', space=vmem, size = 0x12000, scoped, tag = 'internal scratch']
  %s0 = inlined_call_operand.hbm [shape: f32[16,2,8,64], index: 0, kind: input, shape index: {}]
  %s1 = inlined_call_operand.hbm [shape: f32[2,64,64], index: 1, kind: input, shape index: {}]
  %s2 = inlined_call_operand.vmem [shape: f32[1,64], index: 2, kind: input, shape index: {}]
  %s3 = inlined_call_operand.vmem [shape: f32[1,64], index: 3, kind: input, shape index: {}]
  %s4 = inlined_call_operand.vmem [shape: f32[128,64], index: 4, kind: output, shape index: {}]
  %s5 = sld [smem:[#allocation0]]
  $region34: #{tpu_custom_call.1} parent=0
    _
  %s7 = ssub.s32 1, %s5
  %s8 = scalar_select 0, %s7, %s5
  $region1: #{tpu_custom_call.1} parent=0
    #allocation2 [shape = 'u8[131072]{0}', space=vmem, size = 0x20000, scoped, tag = 'input window, operand 0, single buffered']
    #allocation3 [shape = 's32[1]{0}', space=sflag, size = 0x4, scoped, tag = 'scoped memory for tpu_custom_call.1']
    #allocation4 [shape = 'u8[65536]{0}', space=vmem, size = 0x10000, scoped, tag = 'input window, operand 1, single buffered']
    #allocation5 [shape = 's32[1]{0}', space=sflag, size = 0x4, scoped, tag = 'scoped memory for tpu_custom_call.1']
    %9 = vsyncpa [#allocation3], 0
    %10 = vsyncpa [#allocation5], 0
    // Predicated region
    $region2: #{tpu_custom_call.1} parent=1 // pred_check
      _
    $region3: #{tpu_custom_call.1} parent=1 // pred_check_branch
      %12 = sbr.rel (0) target = $region5
    $region4: #{tpu_custom_call.1} parent=1 // pred_region
      %s14 = ssub.s32 4096, 4096
      %15 = vsyncadd [#allocation3], %s14
      %s16 = sshll.u32 [#allocation2], 4
      %s17 = int_to_ptr.vmem [resolvable:$true] %s16
      %22 = dma.hbm_to_vmem [thread:$0]  %s0, 4096, %s17, [#allocation3], 128, 128, 8
    $region5: #{tpu_custom_call.1} parent=1 // pred_fallthru
      _
    // Predicated region
    $region6: #{tpu_custom_call.1} parent=1 // pred_check
      _
    $region7: #{tpu_custom_call.1} parent=1 // pred_check_branch
      %24 = sbr.rel (0) target = $region9
    $region8: #{tpu_custom_call.1} parent=1 // pred_region
      %s26 = ssub.s32 2048, 2048
      %27 = vsyncadd [#allocation5], %s26
      %s28 = sshll.u32 [#allocation4], 4
      %s29 = int_to_ptr.vmem [resolvable:$true] %s28
      %34 = dma.hbm_to_vmem [thread:$0]  %s1, 2048, %s29, [#allocation5], 128, 128, 8
    $region9: #{tpu_custom_call.1} parent=1 // pred_fallthru
      _
    // Predicated region
    $region10: #{tpu_custom_call.1} parent=1 // pred_check
      _
    $region11: #{tpu_custom_call.1} parent=1 // pred_check_branch
      %36 = sbr.rel (0) target = $region13
    $region12: #{tpu_custom_call.1} parent=1 // pred_region
      _
    $region13: #{tpu_custom_call.1} parent=1 // pred_fallthru
      _
    // Predicated region
    $region14: #{tpu_custom_call.1} parent=1 // pred_check
      _
    $region15: #{tpu_custom_call.1} parent=1 // pred_check_branch
      %38 = sbr.rel (0) target = $region17
    $region16: #{tpu_custom_call.1} parent=1 // pred_region
      _
    $region17: #{tpu_custom_call.1} parent=1 // pred_fallthru
      _
    // Predicated region
    $region18: #{tpu_custom_call.1} parent=1 // pred_check
      _
    $region19: #{tpu_custom_call.1} parent=1 // pred_check_branch
      %40 = sbr.rel (0) target = $region21
    $region20: #{tpu_custom_call.1} parent=1 // pred_region
      %41 = dma.done [#allocation3], 4096
    $region21: #{tpu_custom_call.1} parent=1 // pred_fallthru
      _
    // Predicated region
    $region22: #{tpu_custom_call.1} parent=1 // pred_check
      _
    $region23: #{tpu_custom_call.1} parent=1 // pred_check_branch
      %43 = sbr.rel (0) target = $region25
    $region24: #{tpu_custom_call.1} parent=1 // pred_region
      %44 = dma.done [#allocation5], 2048
    $region25: #{tpu_custom_call.1} parent=1 // pred_fallthru
      _
    %v45 = vld [vmem:[#allocation2] sm:$0xff]
    %v46 = vld [vmem:[#allocation2 + $0x10] sm:$0xff]
    %v47 = vld [vmem:[#allocation2 + $0x20] sm:$0xff]
    %v48 = vld [vmem:[#allocation2 + $0x30] sm:$0xff]
    %v49 = vld [vmem:[#allocation2 + $0x40] sm:$0xff]
    %v50 = vld [vmem:[#allocation2 + $0x50] sm:$0xff]
    %v51 = vld [vmem:[#allocation2 + $0x60] sm:$0xff]
    %v52 = vld [vmem:[#allocation2 + $0x70] sm:$0xff]
    %v53 = vld [vmem:[#allocation2 + $0x80] sm:$0xff]
    %v54 = vld [vmem:[#allocation2 + $0x90] sm:$0xff]
    %v55 = vld [vmem:[#allocation2 + $0xa0] sm:$0xff]
    %v56 = vld [vmem:[#allocation2 + $0xb0] sm:$0xff]
    %v57 = vld [vmem:[#allocation2 + $0xc0] sm:$0xff]
    %v58 = vld [vmem:[#allocation2 + $0xd0] sm:$0xff]
    %v59 = vld [vmem:[#allocation2 + $0xe0] sm:$0xff]
    %v60 = vld [vmem:[#allocation2 + $0xf0] sm:$0xff]
    %s61 = scalar_lea.vmem [#allocation2], 8
    %v62 = vld [vmem:[%s61] sm:$0xff]
    %v63 = vld [vmem:[%s61 + $0x10] sm:$0xff]
    %v64 = vld [vmem:[%s61 + $0x20] sm:$0xff]
    %v65 = vld [vmem:[%s61 + $0x30] sm:$0xff]
    %v66 = vld [vmem:[%s61 + $0x40] sm:$0xff]
    %v67 = vld [vmem:[%s61 + $0x50] sm:$0xff]
    %v68 = vld [vmem:[%s61 + $0x60] sm:$0xff]
    %v69 = vld [vmem:[%s61 + $0x70] sm:$0xff]
    %v70 = vld [vmem:[%s61 + $0x80] sm:$0xff]
    %v71 = vld [vmem:[%s61 + $0x90] sm:$0xff]
    %v72 = vld [vmem:[%s61 + $0xa0] sm:$0xff]
    %v73 = vld [vmem:[%s61 + $0xb0] sm:$0xff]
    %v74 = vld [vmem:[%s61 + $0xc0] sm:$0xff]
    %v75 = vld [vmem:[%s61 + $0xd0] sm:$0xff]
    %v76 = vld [vmem:[%s61 + $0xe0] sm:$0xff]
    %v77 = vld [vmem:[%s61 + $0xf0] sm:$0xff]
    %v78 = vld [vmem:[#allocation4] sm:$0xff]
    %v79 = vld [vmem:[#allocation4 + $0x8] sm:$0xff]
    %v80 = vld [vmem:[#allocation4 + $0x10] sm:$0xff]
    %v81 = vld [vmem:[#allocation4 + $0x18] sm:$0xff]
    %v82 = vld [vmem:[#allocation4 + $0x20] sm:$0xff]
    %v83 = vld [vmem:[#allocation4 + $0x28] sm:$0xff]
    %v84 = vld [vmem:[#allocation4 + $0x30] sm:$0xff]
    %v85 = vld [vmem:[#allocation4 + $0x38] sm:$0xff]
    %s86 = scalar_lea.vmem [#allocation4], 64
    %v87 = vld [vmem:[%s86] sm:$0xff]
    %v88 = vld [vmem:[%s86 + $0x8] sm:$0xff]
    %v89 = vld [vmem:[%s86 + $0x10] sm:$0xff]
    %v90 = vld [vmem:[%s86 + $0x18] sm:$0xff]
    %v91 = vld [vmem:[%s86 + $0x20] sm:$0xff]
    %v92 = vld [vmem:[%s86 + $0x28] sm:$0xff]
    %v93 = vld [vmem:[%s86 + $0x30] sm:$0xff]
    %v94 = vld [vmem:[%s86 + $0x38] sm:$0xff]
    %vm95 = vcmask 523264
    %v97 = vsel %vm95, %v62, 0
    %v100 = vsel %vm95, %v63, 0
    %v103 = vsel %vm95, %v64, 0
    %v106 = vsel %vm95, %v65, 0
    %v109 = vsel %vm95, %v66, 0
    %v112 = vsel %vm95, %v67, 0
    %v115 = vsel %vm95, %v68, 0
    %v118 = vsel %vm95, %v69, 0
    %v121 = vsel %vm95, %v70, 0
    %v124 = vsel %vm95, %v71, 0
    %v127 = vsel %vm95, %v72, 0
    %v130 = vsel %vm95, %v73, 0
    %v133 = vsel %vm95, %v74, 0
    %v136 = vsel %vm95, %v75, 0
    %v139 = vsel %vm95, %v76, 0
    %v142 = vsel %vm95, %v77, 0
    %144 = vmatprep.subr.mxu0 0.0
    %145 = vmatpush1.msra.mxu0 %v87
    %146 = vmatprep.subr.mxu0 0.0
    %147 = vmatpush1.msra.mxu0 %v88
    %148 = vmatprep.subr.mxu0 0.0
    %149 = vmatpush1.msra.mxu0 %v89
    %150 = vmatprep.subr.mxu0 0.0
    %151 = vmatpush1.msra.mxu0 %v90
    %152 = vmatprep.subr.mxu0 0.0
    %153 = vmatpush1.msra.mxu0 %v91
    %154 = vmatprep.subr.mxu0 0.0
    %155 = vmatpush1.msra.mxu0 %v92
    %156 = vmatprep.subr.mxu0 0.0
    %157 = vmatpush1.msra.mxu0 %v93
    %158 = vmatprep.subr.mxu0 0.0
    %159 = vmatpush1.msra.mxu0 %v94
    %160 = vmatprep.subr.mxu0 0.0
    %161 = vmatpush1.msra.mxu0 0.0
    %162 = vmatprep.subr.mxu0 0.0
    %163 = vmatpush1.msra.mxu0 0.0
    %164 = vmatprep.subr.mxu0 0.0
    %165 = vmatpush1.msra.mxu0 0.0
    %166 = vmatprep.subr.mxu0 0.0
    %167 = vmatpush1.msra.mxu0 0.0
    %168 = vmatprep.subr.mxu0 0.0
    %169 = vmatpush1.msra.mxu0 0.0
    %170 = vmatprep.subr.mxu0 0.0
    %171 = vmatpush1.msra.mxu0 0.0
    %172 = vmatprep.subr.mxu0 0.0
    %173 = vmatpush1.msra.mxu0 0.0
    %174 = vmatprep.subr.mxu0 0.0
    %175 = vmatpush1.msra.mxu0 0.0
    %176 = vmatprep.subr.mxu0 0.0
    %177 = vmatpush1.msra.mxu0 0.0
    %178 = vmatprep.subr.mxu0 0.0
    %179 = vmatpush1.msra.mxu0 0.0
    %180 = vmatprep.subr.mxu0 0.0
    %181 = vmatpush1.msra.mxu0 0.0
    %182 = vmatprep.subr.mxu0 0.0
    %183 = vmatpush1.msra.mxu0 0.0
    %184 = vmatprep.subr.mxu0 0.0
    %185 = vmatpush1.msra.mxu0 0.0
    %186 = vmatprep.subr.mxu0 0.0
    %187 = vmatpush1.msra.mxu0 0.0
    %188 = vmatprep.subr.mxu0 0.0
    %189 = vmatpush1.msra.mxu0 0.0
    %190 = vmatprep.subr.mxu0 0.0
    %191 = vmatpush1.msra.mxu0 0.0
    %192 = vmatprep.subr.mxu0 0.0
    %193 = vmatpush1.msra.mxu0 0.0
    %194 = vmatprep.subr.mxu0 0.0
    %195 = vmatpush1.msra.mxu0 0.0
    %196 = vmatprep.subr.mxu0 0.0
    %197 = vmatpush1.msra.mxu0 0.0
    %198 = vmatprep.subr.mxu0 0.0
    %199 = vmatpush1.msra.mxu0 0.0
    %200 = vmatprep.subr.mxu0 0.0
    %201 = vmatpush1.msra.mxu0 0.0
    %202 = vmatprep.subr.mxu0 0.0
    %203 = vmatpush1.msra.mxu0 0.0
    %204 = vmatprep.subr.mxu0 0.0
    %205 = vmatpush1.msra.mxu0 0.0
    %206 = vmatprep.subr.mxu0 0.0
    %207 = vmatpush1.msra.mxu0 0.0
    %208 = vmatprep.mubr.f32.mxu0 0.0
    %209 = vmatmul.mubr.f32.gmra.mrb[0].mxu0 %v97
    %v210 = vpop.f32.mrb[0].mxu0
    %v211 = vadd.f32 0.0, %v210
    %v212 = vpop.f32.mrb[0].mxu0
    %213 = vmatprep.mubr.f32.mxu0 0.0
    %214 = vmatmul.mubr.f32.gmra.mrb[0].mxu0 %v100
    %v215 = vpop.f32.mrb[0].mxu0
    %v216 = vadd.f32 0.0, %v215
    %v217 = vpop.f32.mrb[0].mxu0
    %218 = vmatprep.mubr.f32.mxu0 0.0
    %219 = vmatmul.mubr.f32.gmra.mrb[0].mxu0 %v103
    %v220 = vpop.f32.mrb[0].mxu0
    %v221 = vadd.f32 0.0, %v220
    %v222 = vpop.f32.mrb[0].mxu0
    %223 = vmatprep.mubr.f32.mxu0 0.0
    %224 = vmatmul.mubr.f32.gmra.mrb[0].mxu0 %v106
    %v225 = vpop.f32.mrb[0].mxu0
    %v226 = vadd.f32 0.0, %v225
    %v227 = vpop.f32.mrb[0].mxu0
    %228 = vmatprep.mubr.f32.mxu0 0.0
    %229 = vmatmul.mubr.f32.gmra.mrb[0].mxu0 %v109
    %v230 = vpop.f32.mrb[0].mxu0
    %v231 = vadd.f32 0.0, %v230
    %v232 = vpop.f32.mrb[0].mxu0
    %233 = vmatprep.mubr.f32.mxu0 0.0
    %234 = vmatmul.mubr.f32.gmra.mrb[0].mxu0 %v112
    %v235 = vpop.f32.mrb[0].mxu0
    %v236 = vadd.f32 0.0, %v235
    %v237 = vpop.f32.mrb[0].mxu0
    %238 = vmatprep.mubr.f32.mxu0 0.0
    %239 = vmatmul.mubr.f32.gmra.mrb[0].mxu0 %v115
    %v240 = vpop.f32.mrb[0].mxu0
    %v241 = vadd.f32 0.0, %v240
    %v242 = vpop.f32.mrb[0].mxu0
    %243 = vmatprep.mubr.f32.mxu0 0.0
    %244 = vmatmul.mubr.f32.gmra.mrb[0].mxu0 %v118
    %v245 = vpop.f32.mrb[0].mxu0
    %v246 = vadd.f32 0.0, %v245
    %v247 = vpop.f32.mrb[0].mxu0
    %248 = vmatprep.mubr.f32.mxu0 0.0
    %249 = vmatmul.mubr.f32.gmra.mrb[0].mxu0 %v121
    %v250 = vpop.f32.mrb[0].mxu0
    %v251 = vadd.f32 0.0, %v250
    %v252 = vpop.f32.mrb[0].mxu0
    %253 = vmatprep.mubr.f32.mxu0 0.0
    %254 = vmatmul.mubr.f32.gmra.mrb[0].mxu0 %v124
    %v255 = vpop.f32.mrb[0].mxu0
    %v256 = vadd.f32 0.0, %v255
    %v257 = vpop.f32.mrb[0].mxu0
    %258 = vmatprep.mubr.f32.mxu0 0.0
    %259 = vmatmul.mubr.f32.gmra.mrb[0].mxu0 %v127
    %v260 = vpop.f32.mrb[0].mxu0
    %v261 = vadd.f32 0.0, %v260
    %v262 = vpop.f32.mrb[0].mxu0
    %263 = vmatprep.mubr.f32.mxu0 0.0
    %264 = vmatmul.mubr.f32.gmra.mrb[0].mxu0 %v130
    %v265 = vpop.f32.mrb[0].mxu0
    %v266 = vadd.f32 0.0, %v265
    %v267 = vpop.f32.mrb[0].mxu0
    %268 = vmatprep.mubr.f32.mxu0 0.0
    %269 = vmatmul.mubr.f32.gmra.mrb[0].mxu0 %v133
    %v270 = vpop.f32.mrb[0].mxu0
    %v271 = vadd.f32 0.0, %v270
    %v272 = vpop.f32.mrb[0].mxu0
    %273 = vmatprep.mubr.f32.mxu0 0.0
    %274 = vmatmul.mubr.f32.gmra.mrb[0].mxu0 %v136
    %v275 = vpop.f32.mrb[0].mxu0
    %v276 = vadd.f32 0.0, %v275
    %v277 = vpop.f32.mrb[0].mxu0
    %278 = vmatprep.mubr.f32.mxu0 0.0
    %279 = vmatmul.mubr.f32.gmra.mrb[0].mxu0 %v139
    %v280 = vpop.f32.mrb[0].mxu0
    %v281 = vadd.f32 0.0, %v280
    %v282 = vpop.f32.mrb[0].mxu0
    %283 = vmatprep.mubr.f32.mxu0 0.0
    %284 = vmatmul.mubr.f32.gmra.mrb[0].mxu0 %v142
    %v285 = vpop.f32.mrb[0].mxu0
    %v286 = vadd.f32 0.0, %v285
    %v287 = vpop.f32.mrb[0].mxu0
    %288 = vdwg.mxu0
    %v290 = vsel %vm95, %v45, 0
    %v293 = vsel %vm95, %v46, 0
    %v296 = vsel %vm95, %v47, 0
    %v299 = vsel %vm95, %v48, 0
    %v302 = vsel %vm95, %v49, 0
    %v305 = vsel %vm95, %v50, 0
    %v308 = vsel %vm95, %v51, 0
    %v311 = vsel %vm95, %v52, 0
    %v314 = vsel %vm95, %v53, 0
    %v317 = vsel %vm95, %v54, 0
    %v320 = vsel %vm95, %v55, 0
    %v323 = vsel %vm95, %v56, 0
    %v326 = vsel %vm95, %v57, 0
    %v329 = vsel %vm95, %v58, 0
    %v332 = vsel %vm95, %v59, 0
    %v335 = vsel %vm95, %v60, 0
    %337 = vmatprep.subr.mxu0 0.0
    %338 = vmatpush1.msra.mxu0 %v78
    %339 = vmatprep.subr.mxu0 0.0
    %340 = vmatpush1.msra.mxu0 %v79
    %341 = vmatprep.subr.mxu0 0.0
    %342 = vmatpush1.msra.mxu0 %v80
    %343 = vmatprep.subr.mxu0 0.0
    %344 = vmatpush1.msra.mxu0 %v81
    %345 = vmatprep.subr.mxu0 0.0
    %346 = vmatpush1.msra.mxu0 %v82
    %347 = vmatprep.subr.mxu0 0.0
    %348 = vmatpush1.msra.mxu0 %v83
    %349 = vmatprep.subr.mxu0 0.0
    %350 = vmatpush1.msra.mxu0 %v84
    %351 = vmatprep.subr.mxu0 0.0
    %352 = vmatpush1.msra.mxu0 %v85
    %353 = vmatprep.subr.mxu0 0.0
    %354 = vmatpush1.msra.mxu0 0.0
    %355 = vmatprep.subr.mxu0 0.0
    %356 = vmatpush1.msra.mxu0 0.0
    %357 = vmatprep.subr.mxu0 0.0
    %358 = vmatpush1.msra.mxu0 0.0
    %359 = vmatprep.subr.mxu0 0.0
    %360 = vmatpush1.msra.mxu0 0.0
    %361 = vmatprep.subr.mxu0 0.0
    %362 = vmatpush1.msra.mxu0 0.0
    %363 = vmatprep.subr.mxu0 0.0
    %364 = vmatpush1.msra.mxu0 0.0
    %365 = vmatprep.subr.mxu0 0.0
    %366 = vmatpush1.msra.mxu0 0.0
    %367 = vmatprep.subr.mxu0 0.0
    %368 = vmatpush1.msra.mxu0 0.0
    %369 = vmatprep.subr.mxu0 0.0
    %370 = vmatpush1.msra.mxu0 0.0
    %371 = vmatprep.subr.mxu0 0.0
    %372 = vmatpush1.msra.mxu0 0.0
    %373 = vmatprep.subr.mxu0 0.0
    %374 = vmatpush1.msra.mxu0 0.0
    %375 = vmatprep.subr.mxu0 0.0
    %376 = vmatpush1.msra.mxu0 0.0
    %377 = vmatprep.subr.mxu0 0.0
    %378 = vmatpush1.msra.mxu0 0.0
    %379 = vmatprep.subr.mxu0 0.0
    %380 = vmatpush1.msra.mxu0 0.0
    %381 = vmatprep.subr.mxu0 0.0
    %382 = vmatpush1.msra.mxu0 0.0
    %383 = vmatprep.subr.mxu0 0.0
    %384 = vmatpush1.msra.mxu0 0.0
    %385 = vmatprep.subr.mxu0 0.0
    %386 = vmatpush1.msra.mxu0 0.0
    %387 = vmatprep.subr.mxu0 0.0
    %388 = vmatpush1.msra.mxu0 0.0
    %389 = vmatprep.subr.mxu0 0.0
    %390 = vmatpush1.msra.mxu0 0.0
    %391 = vmatprep.subr.mxu0 0.0
    %392 = vmatpush1.msra.mxu0 0.0
    %393 = vmatprep.subr.mxu0 0.0
    %394 = vmatpush1.msra.mxu0 0.0
    %395 = vmatprep.subr.mxu0 0.0
    %396 = vmatpush1.msra.mxu0 0.0
    %397 = vmatprep.subr.mxu0 0.0
    %398 = vmatpush1.msra.mxu0 0.0
    %399 = vmatprep.subr.mxu0 0.0
    %400 = vmatpush1.msra.mxu0 0.0
    %401 = vmatprep.mubr.f32.mxu0 0.0
    %402 = vmatmul.mubr.f32.gmra.mrb[0].mxu0 %v290
    %v403 = vpop.f32.mrb[0].mxu0
    %v404 = vadd.f32 %v211, %v403
    %v405 = vpop.f32.mrb[0].mxu0
    %406 = vmatprep.mubr.f32.mxu0 0.0
    %407 = vmatmul.mubr.f32.gmra.mrb[0].mxu0 %v293
    %v408 = vpop.f32.mrb[0].mxu0
    %v409 = vadd.f32 %v216, %v408
    %v410 = vpop.f32.mrb[0].mxu0
    %411 = vmatprep.mubr.f32.mxu0 0.0
    %412 = vmatmul.mubr.f32.gmra.mrb[0].mxu0 %v296
    %v413 = vpop.f32.mrb[0].mxu0
    %v414 = vadd.f32 %v221, %v413
    %v415 = vpop.f32.mrb[0].mxu0
    %416 = vmatprep.mubr.f32.mxu0 0.0
    %417 = vmatmul.mubr.f32.gmra.mrb[0].mxu0 %v299
    %v418 = vpop.f32.mrb[0].mxu0
    %v419 = vadd.f32 %v226, %v418
    %v420 = vpop.f32.mrb[0].mxu0
    %421 = vmatprep.mubr.f32.mxu0 0.0
    %422 = vmatmul.mubr.f32.gmra.mrb[0].mxu0 %v302
    %v423 = vpop.f32.mrb[0].mxu0
    %v424 = vadd.f32 %v231, %v423
    %v425 = vpop.f32.mrb[0].mxu0
    %426 = vmatprep.mubr.f32.mxu0 0.0
    %427 = vmatmul.mubr.f32.gmra.mrb[0].mxu0 %v305
    %v428 = vpop.f32.mrb[0].mxu0
    %v429 = vadd.f32 %v236, %v428
    %v430 = vpop.f32.mrb[0].mxu0
    %431 = vmatprep.mubr.f32.mxu0 0.0
    %432 = vmatmul.mubr.f32.gmra.mrb[0].mxu0 %v308
    %v433 = vpop.f32.mrb[0].mxu0
    %v434 = vadd.f32 %v241, %v433
    %v435 = vpop.f32.mrb[0].mxu0
    %436 = vmatprep.mubr.f32.mxu0 0.0
    %437 = vmatmul.mubr.f32.gmra.mrb[0].mxu0 %v311
    %v438 = vpop.f32.mrb[0].mxu0
    %v439 = vadd.f32 %v246, %v438
    %v440 = vpop.f32.mrb[0].mxu0
    %441 = vmatprep.mubr.f32.mxu0 0.0
    %442 = vmatmul.mubr.f32.gmra.mrb[0].mxu0 %v314
    %v443 = vpop.f32.mrb[0].mxu0
    %v444 = vadd.f32 %v251, %v443
    %v445 = vpop.f32.mrb[0].mxu0
    %446 = vmatprep.mubr.f32.mxu0 0.0
    %447 = vmatmul.mubr.f32.gmra.mrb[0].mxu0 %v317
    %v448 = vpop.f32.mrb[0].mxu0
    %v449 = vadd.f32 %v256, %v448
    %v450 = vpop.f32.mrb[0].mxu0
    %451 = vmatprep.mubr.f32.mxu0 0.0
    %452 = vmatmul.mubr.f32.gmra.mrb[0].mxu0 %v320
    %v453 = vpop.f32.mrb[0].mxu0
    %v454 = vadd.f32 %v261, %v453
    %v455 = vpop.f32.mrb[0].mxu0
    %456 = vmatprep.mubr.f32.mxu0 0.0
    %457 = vmatmul.mubr.f32.gmra.mrb[0].mxu0 %v323
    %v458 = vpop.f32.mrb[0].mxu0
    %v459 = vadd.f32 %v266, %v458
    %v460 = vpop.f32.mrb[0].mxu0
    %461 = vmatprep.mubr.f32.mxu0 0.0
    %462 = vmatmul.mubr.f32.gmra.mrb[0].mxu0 %v326
    %v463 = vpop.f32.mrb[0].mxu0
    %v464 = vadd.f32 %v271, %v463
    %v465 = vpop.f32.mrb[0].mxu0
    %466 = vmatprep.mubr.f32.mxu0 0.0
    %467 = vmatmul.mubr.f32.gmra.mrb[0].mxu0 %v329
    %v468 = vpop.f32.mrb[0].mxu0
    %v469 = vadd.f32 %v276, %v468
    %v470 = vpop.f32.mrb[0].mxu0
    %471 = vmatprep.mubr.f32.mxu0 0.0
    %472 = vmatmul.mubr.f32.gmra.mrb[0].mxu0 %v332
    %v473 = vpop.f32.mrb[0].mxu0
    %v474 = vadd.f32 %v281, %v473
    %v475 = vpop.f32.mrb[0].mxu0
    %476 = vmatprep.mubr.f32.mxu0 0.0
    %477 = vmatmul.mubr.f32.gmra.mrb[0].mxu0 %v335
    %v478 = vpop.f32.mrb[0].mxu0
    %v479 = vadd.f32 %v286, %v478
    %v480 = vpop.f32.mrb[0].mxu0
    %481 = vdwg.mxu0
    %v482 = vsel %vm95, %v404, 0.0
    %483 = vadd.xlane.f32.xlu0 %v482
    %v484 = vpop.xlane.xlu0 %483
    %v485 = vsel %vm95, %v409, 0.0
    %486 = vadd.xlane.f32.xlu0 %v485
    %v487 = vpop.xlane.xlu0 %486
    %v488 = vsel %vm95, %v414, 0.0
    %489 = vadd.xlane.f32.xlu0 %v488
    %v490 = vpop.xlane.xlu0 %489
    %v491 = vsel %vm95, %v419, 0.0
    %492 = vadd.xlane.f32.xlu0 %v491
    %v493 = vpop.xlane.xlu0 %492
    %v494 = vsel %vm95, %v424, 0.0
    %495 = vadd.xlane.f32.xlu0 %v494
    %v496 = vpop.xlane.xlu0 %495
    %v497 = vsel %vm95, %v429, 0.0
    %498 = vadd.xlane.f32.xlu0 %v497
    %v499 = vpop.xlane.xlu0 %498
    %v500 = vsel %vm95, %v434, 0.0
    %501 = vadd.xlane.f32.xlu0 %v500
    %v502 = vpop.xlane.xlu0 %501
    %v503 = vsel %vm95, %v439, 0.0
    %504 = vadd.xlane.f32.xlu0 %v503
    %v505 = vpop.xlane.xlu0 %504
    %v506 = vsel %vm95, %v444, 0.0
    %507 = vadd.xlane.f32.xlu0 %v506
    %v508 = vpop.xlane.xlu0 %507
    %v509 = vsel %vm95, %v449, 0.0
    %510 = vadd.xlane.f32.xlu0 %v509
    %v511 = vpop.xlane.xlu0 %510
    %v512 = vsel %vm95, %v454, 0.0
    %513 = vadd.xlane.f32.xlu0 %v512
    %v514 = vpop.xlane.xlu0 %513
    %v515 = vsel %vm95, %v459, 0.0
    %516 = vadd.xlane.f32.xlu0 %v515
    %v517 = vpop.xlane.xlu0 %516
    %v518 = vsel %vm95, %v464, 0.0
    %519 = vadd.xlane.f32.xlu0 %v518
    %v520 = vpop.xlane.xlu0 %519
    %v521 = vsel %vm95, %v469, 0.0
    %522 = vadd.xlane.f32.xlu0 %v521
    %v523 = vpop.xlane.xlu0 %522
    %v524 = vsel %vm95, %v474, 0.0
    %525 = vadd.xlane.f32.xlu0 %v524
    %v526 = vpop.xlane.xlu0 %525
    %v527 = vsel %vm95, %v479, 0.0
    %528 = vadd.xlane.f32.xlu0 %v527
    %v529 = vpop.xlane.xlu0 %528
    %v530 = vmul.f32 %v404, %v404
    %v531 = vmul.f32 %v409, %v409
    %v532 = vmul.f32 %v414, %v414
    %v533 = vmul.f32 %v419, %v419
    %v534 = vmul.f32 %v424, %v424
    %v535 = vmul.f32 %v429, %v429
    %v536 = vmul.f32 %v434, %v434
    %v537 = vmul.f32 %v439, %v439
    %v538 = vmul.f32 %v444, %v444
    %v539 = vmul.f32 %v449, %v449
    %v540 = vmul.f32 %v454, %v454
    %v541 = vmul.f32 %v459, %v459
    %v542 = vmul.f32 %v464, %v464
    %v543 = vmul.f32 %v469, %v469
    %v544 = vmul.f32 %v474, %v474
    %v545 = vmul.f32 %v479, %v479
    %v546 = vsel %vm95, %v530, 0.0
    %547 = vadd.xlane.f32.xlu0 %v546
    %v548 = vpop.xlane.xlu0 %547
    %v549 = vsel %vm95, %v531, 0.0
    %550 = vadd.xlane.f32.xlu0 %v549
    %v551 = vpop.xlane.xlu0 %550
    %v552 = vsel %vm95, %v532, 0.0
    %553 = vadd.xlane.f32.xlu0 %v552
    %v554 = vpop.xlane.xlu0 %553
    %v555 = vsel %vm95, %v533, 0.0
    %556 = vadd.xlane.f32.xlu0 %v555
    %v557 = vpop.xlane.xlu0 %556
    %v558 = vsel %vm95, %v534, 0.0
    %559 = vadd.xlane.f32.xlu0 %v558
    %v560 = vpop.xlane.xlu0 %559
    %v561 = vsel %vm95, %v535, 0.0
    %562 = vadd.xlane.f32.xlu0 %v561
    %v563 = vpop.xlane.xlu0 %562
    %v564 = vsel %vm95, %v536, 0.0
    %565 = vadd.xlane.f32.xlu0 %v564
    %v566 = vpop.xlane.xlu0 %565
    %v567 = vsel %vm95, %v537, 0.0
    %568 = vadd.xlane.f32.xlu0 %v567
    %v569 = vpop.xlane.xlu0 %568
    %v570 = vsel %vm95, %v538, 0.0
    %571 = vadd.xlane.f32.xlu0 %v570
    %v572 = vpop.xlane.xlu0 %571
    %v573 = vsel %vm95, %v539, 0.0
    %574 = vadd.xlane.f32.xlu0 %v573
    %v575 = vpop.xlane.xlu0 %574
    %v576 = vsel %vm95, %v540, 0.0
    %577 = vadd.xlane.f32.xlu0 %v576
    %v578 = vpop.xlane.xlu0 %577
    %v579 = vsel %vm95, %v541, 0.0
    %580 = vadd.xlane.f32.xlu0 %v579
    %v581 = vpop.xlane.xlu0 %580
    %v582 = vsel %vm95, %v542, 0.0
    %583 = vadd.xlane.f32.xlu0 %v582
    %v584 = vpop.xlane.xlu0 %583
    %v585 = vsel %vm95, %v543, 0.0
    %586 = vadd.xlane.f32.xlu0 %v585
    %v587 = vpop.xlane.xlu0 %586
    %v588 = vsel %vm95, %v544, 0.0
    %589 = vadd.xlane.f32.xlu0 %v588
    %v590 = vpop.xlane.xlu0 %589
    %v591 = vsel %vm95, %v545, 0.0
    %592 = vadd.xlane.f32.xlu0 %v591
    %v593 = vpop.xlane.xlu0 %592
    %v594 = vmul.f32 %v484, 0.015625
    %v595 = vmul.f32 %v487, 0.015625
    %v596 = vmul.f32 %v490, 0.015625
    %v597 = vmul.f32 %v493, 0.015625
    %v598 = vmul.f32 %v496, 0.015625
    %v599 = vmul.f32 %v499, 0.015625
    %v600 = vmul.f32 %v502, 0.015625
    %v601 = vmul.f32 %v505, 0.015625
    %v602 = vmul.f32 %v508, 0.015625
    %v603 = vmul.f32 %v511, 0.015625
    %v604 = vmul.f32 %v514, 0.015625
    %v605 = vmul.f32 %v517, 0.015625
    %v606 = vmul.f32 %v520, 0.015625
    %v607 = vmul.f32 %v523, 0.015625
    %v608 = vmul.f32 %v526, 0.015625
    %v609 = vmul.f32 %v529, 0.015625
    %v610 = vmul.f32 %v548, 0.015625
    %v611 = vmul.f32 %v551, 0.015625
    %v612 = vmul.f32 %v554, 0.015625
    %v613 = vmul.f32 %v557, 0.015625
    %v614 = vmul.f32 %v560, 0.015625
    %v615 = vmul.f32 %v563, 0.015625
    %v616 = vmul.f32 %v566, 0.015625
    %v617 = vmul.f32 %v569, 0.015625
    %v618 = vmul.f32 %v572, 0.015625
    %v619 = vmul.f32 %v575, 0.015625
    %v620 = vmul.f32 %v578, 0.015625
    %v621 = vmul.f32 %v581, 0.015625
    %v622 = vmul.f32 %v584, 0.015625
    %v623 = vmul.f32 %v587, 0.015625
    %v624 = vmul.f32 %v590, 0.015625
    %v625 = vmul.f32 %v593, 0.015625
    %v626 = vmul.f32 %v594, %v594
    %v627 = vmul.f32 %v595, %v595
    %v628 = vmul.f32 %v596, %v596
    %v629 = vmul.f32 %v597, %v597
    %v630 = vmul.f32 %v598, %v598
    %v631 = vmul.f32 %v599, %v599
    %v632 = vmul.f32 %v600, %v600
    %v633 = vmul.f32 %v601, %v601
    %v634 = vmul.f32 %v602, %v602
    %v635 = vmul.f32 %v603, %v603
    %v636 = vmul.f32 %v604, %v604
    %v637 = vmul.f32 %v605, %v605
    %v638 = vmul.f32 %v606, %v606
    %v639 = vmul.f32 %v607, %v607
    %v640 = vmul.f32 %v608, %v608
    %v641 = vmul.f32 %v609, %v609
    %v642 = vsub.f32 %v610, %v626
    %v643 = vsub.f32 %v611, %v627
    %v644 = vsub.f32 %v612, %v628
    %v645 = vsub.f32 %v613, %v629
    %v646 = vsub.f32 %v614, %v630
    %v647 = vsub.f32 %v615, %v631
    %v648 = vsub.f32 %v616, %v632
    %v649 = vsub.f32 %v617, %v633
    %v650 = vsub.f32 %v618, %v634
    %v651 = vsub.f32 %v619, %v635
    %v652 = vsub.f32 %v620, %v636
    %v653 = vsub.f32 %v621, %v637
    %v654 = vsub.f32 %v622, %v638
    %v655 = vsub.f32 %v623, %v639
    %v656 = vsub.f32 %v624, %v640
    %v657 = vsub.f32 %v625, %v641
    %v658 = vmax.f32 %v642, 0.0
    %v659 = vmax.f32 %v643, 0.0
    %v660 = vmax.f32 %v644, 0.0
    %v661 = vmax.f32 %v645, 0.0
    %v662 = vmax.f32 %v646, 0.0
    %v663 = vmax.f32 %v647, 0.0
    %v664 = vmax.f32 %v648, 0.0
    %v665 = vmax.f32 %v649, 0.0
    %v666 = vmax.f32 %v650, 0.0
    %v667 = vmax.f32 %v651, 0.0
    %v668 = vmax.f32 %v652, 0.0
    %v669 = vmax.f32 %v653, 0.0
    %v670 = vmax.f32 %v654, 0.0
    %v671 = vmax.f32 %v655, 0.0
    %v672 = vmax.f32 %v656, 0.0
    %v673 = vmax.f32 %v657, 0.0
    %v674 = vadd.f32 %v658, 1e-05
    %v675 = vadd.f32 %v659, 1e-05
    %v676 = vadd.f32 %v660, 1e-05
    %v677 = vadd.f32 %v661, 1e-05
    %v678 = vadd.f32 %v662, 1e-05
    %v679 = vadd.f32 %v663, 1e-05
    %v680 = vadd.f32 %v664, 1e-05
    %v681 = vadd.f32 %v665, 1e-05
    %v682 = vadd.f32 %v666, 1e-05
    %v683 = vadd.f32 %v667, 1e-05
    %v684 = vadd.f32 %v668, 1e-05
    %v685 = vadd.f32 %v669, 1e-05
    %v686 = vadd.f32 %v670, 1e-05
    %v687 = vadd.f32 %v671, 1e-05
    %v688 = vadd.f32 %v672, 1e-05
    %v689 = vadd.f32 %v673, 1e-05
    %v690 = vrsqrt.pop %v674
    %v691 = vrsqrt.pop %v675
    %v692 = vrsqrt.pop %v676
    %v693 = vrsqrt.pop %v677
    %v694 = vrsqrt.pop %v678
    %v695 = vrsqrt.pop %v679
    %v696 = vrsqrt.pop %v680
    %v697 = vrsqrt.pop %v681
    %v698 = vrsqrt.pop %v682
    %v699 = vrsqrt.pop %v683
    %v700 = vrsqrt.pop %v684
    %v701 = vrsqrt.pop %v685
    %v702 = vrsqrt.pop %v686
    %v703 = vrsqrt.pop %v687
    %v704 = vrsqrt.pop %v688
    %v705 = vrsqrt.pop %v689
    %v706 = vld [vmem:[%s2] sm:$0x1]
    %v707 = vld [vmem:[%s3] sm:$0x1]
    %v708 = vsub.f32 %v404, %v594
    %v709 = vsub.f32 %v409, %v595
    %v710 = vsub.f32 %v414, %v596
    %v711 = vsub.f32 %v419, %v597
    %v712 = vsub.f32 %v424, %v598
    %v713 = vsub.f32 %v429, %v599
    %v714 = vsub.f32 %v434, %v600
    %v715 = vsub.f32 %v439, %v601
    %v716 = vsub.f32 %v444, %v602
    %v717 = vsub.f32 %v449, %v603
    %v718 = vsub.f32 %v454, %v604
    %v719 = vsub.f32 %v459, %v605
    %v720 = vsub.f32 %v464, %v606
    %v721 = vsub.f32 %v469, %v607
    %v722 = vsub.f32 %v474, %v608
    %v723 = vsub.f32 %v479, %v609
    %v724 = vmul.f32 %v708, %v690
    %v725 = vmul.f32 %v709, %v691
    %v726 = vmul.f32 %v710, %v692
    %v727 = vmul.f32 %v711, %v693
    %v728 = vmul.f32 %v712, %v694
    %v729 = vmul.f32 %v713, %v695
    %v730 = vmul.f32 %v714, %v696
    %v731 = vmul.f32 %v715, %v697
    %v732 = vmul.f32 %v716, %v698
    %v733 = vmul.f32 %v717, %v699
    %v734 = vmul.f32 %v718, %v700
    %v735 = vmul.f32 %v719, %v701
    %v736 = vmul.f32 %v720, %v702
    %v737 = vmul.f32 %v721, %v703
    %v738 = vmul.f32 %v722, %v704
    %v739 = vmul.f32 %v723, %v705
    %v741 = vlaneseq
    %v742 = vshrl.u32 %v741, 7
    %v743 = vsub.s32 0, %v742
    %v744 = vrot.slane %v706, %v743
    %v746 = vmul.f32 %v724, %v744
    %v747 = vmul.f32 %v725, %v744
    %v748 = vmul.f32 %v726, %v744
    %v749 = vmul.f32 %v727, %v744
    %v750 = vmul.f32 %v728, %v744
    %v751 = vmul.f32 %v729, %v744
    %v752 = vmul.f32 %v730, %v744
    %v753 = vmul.f32 %v731, %v744
    %v754 = vmul.f32 %v732, %v744
    %v755 = vmul.f32 %v733, %v744
    %v756 = vmul.f32 %v734, %v744
    %v757 = vmul.f32 %v735, %v744
    %v758 = vmul.f32 %v736, %v744
    %v759 = vmul.f32 %v737, %v744
    %v760 = vmul.f32 %v738, %v744
    %v761 = vmul.f32 %v739, %v744
    %v763 = vlaneseq
    %v764 = vshrl.u32 %v763, 7
    %v765 = vsub.s32 0, %v764
    %v766 = vrot.slane %v707, %v765
    %v768 = vadd.f32 %v746, %v766
    %v769 = vadd.f32 %v747, %v766
    %v770 = vadd.f32 %v748, %v766
    %v771 = vadd.f32 %v749, %v766
    %v772 = vadd.f32 %v750, %v766
    %v773 = vadd.f32 %v751, %v766
    %v774 = vadd.f32 %v752, %v766
    %v775 = vadd.f32 %v753, %v766
    %v776 = vadd.f32 %v754, %v766
    %v777 = vadd.f32 %v755, %v766
    %v778 = vadd.f32 %v756, %v766
    %v779 = vadd.f32 %v757, %v766
    %v780 = vadd.f32 %v758, %v766
    %v781 = vadd.f32 %v759, %v766
    %v782 = vadd.f32 %v760, %v766
    %v783 = vadd.f32 %v761, %v766
    %784 = vst.msk [vmem:[%s4] sm:$0xff] %vm95, %v768
    %785 = vst.msk [vmem:[%s4 + $0x8] sm:$0xff] %vm95, %v769
    %786 = vst.msk [vmem:[%s4 + $0x10] sm:$0xff] %vm95, %v770
    %787 = vst.msk [vmem:[%s4 + $0x18] sm:$0xff] %vm95, %v771
    %788 = vst.msk [vmem:[%s4 + $0x20] sm:$0xff] %vm95, %v772
    %789 = vst.msk [vmem:[%s4 + $0x28] sm:$0xff] %vm95, %v773
    %790 = vst.msk [vmem:[%s4 + $0x30] sm:$0xff] %vm95, %v774
    %791 = vst.msk [vmem:[%s4 + $0x38] sm:$0xff] %vm95, %v775
    %792 = vst.msk [vmem:[%s4 + $0x40] sm:$0xff] %vm95, %v776
    %793 = vst.msk [vmem:[%s4 + $0x48] sm:$0xff] %vm95, %v777
    %794 = vst.msk [vmem:[%s4 + $0x50] sm:$0xff] %vm95, %v778
    %795 = vst.msk [vmem:[%s4 + $0x58] sm:$0xff] %vm95, %v779
    %796 = vst.msk [vmem:[%s4 + $0x60] sm:$0xff] %vm95, %v780
    %797 = vst.msk [vmem:[%s4 + $0x68] sm:$0xff] %vm95, %v781
    %798 = vst.msk [vmem:[%s4 + $0x70] sm:$0xff] %vm95, %v782
    %799 = vst.msk [vmem:[%s4 + $0x78] sm:$0xff] %vm95, %v783
    // Predicated region
    $region26: #{tpu_custom_call.1} parent=1 // pred_check
      _
    $region27: #{tpu_custom_call.1} parent=1 // pred_check_branch
      %801 = sbr.rel (0) target = $region29
    $region28: #{tpu_custom_call.1} parent=1 // pred_region
      _
    $region29: #{tpu_custom_call.1} parent=1 // pred_fallthru
      _
    // Predicated region
    $region30: #{tpu_custom_call.1} parent=1 // pred_check
      _
    $region31: #{tpu_custom_call.1} parent=1 // pred_check_branch
      %803 = sbr.rel (0) target = $region33
    $region32: #{tpu_custom_call.1} parent=1 // pred_region
      _
    $region33: #{tpu_custom_call.1} parent=1 // pred_fallthru
      _
    %804 = vsyncpa [#allocation3], 1
    %805 = vsyncpa [#allocation5], 1

</llo_original>
